<compile_context>
chip_gen: v5e
topology: v5e:2x2
jax: 0.10.0
libtpu: 0.0.40
codegen_flags: <defaults>
</compile_context>

<pallas_src>
import jax
import jax.numpy as jnp
from jax.experimental import pallas as pl
from jax.experimental.pallas import tpu as pltpu

_F = 27                        # stage1 feature count
_ROW_GROUP = 128               # original rows folded into one lane-dense flat row
_FLAT_LANES = _F * _ROW_GROUP  # 3456 = lcm-friendly, multiple of 128


def _num_core_splits():
    """2 grid splits on dual-TensorCore chips (v4/v5p megacore, v7x), else 1."""
    try:
        kind = jax.devices()[0].device_kind.lower()
    except Exception:
        return 1
    if "lite" in kind or "v5e" in kind or "v6e" in kind:
        return 1                       # single TensorCore per chip
    if "v7" in kind or "7x" in kind or "v4" in kind or "v5p" in kind \
            or kind.strip().endswith("v5"):
        return 2                       # dual TensorCore / megacore
    return 1


def _make_colsum_kernel(tile_rows, steps_per_split, r_rows, needs_mask):
    """Accumulate column sums of the flat (R, 3456) view into o_ref (1, 3456)."""

    def kernel(x_ref, o_ref):
        i = pl.program_id(1)

        @pl.when(i == 0)
        def _init():
            o_ref[...] = jnp.zeros_like(o_ref)

        if needs_mask:
            # Logical (unclamped) block index; the index_map clamps the DMA so
            # it never reads out of bounds, and this mask zeroes any rows that
            # logically fall past the end of the array.
            blk = pl.program_id(0) * steps_per_split + i
            remaining = r_rows - blk * tile_rows

            @pl.when(remaining >= tile_rows)
            def _full_tile():
                o_ref[...] += jnp.sum(x_ref[...], axis=0, keepdims=True)

            @pl.when(remaining < tile_rows)
            def _ragged_tile():
                row_ids = jax.lax.broadcasted_iota(jnp.int32, x_ref.shape, 0)
                x = jnp.where(row_ids < remaining, x_ref[...], 0.0)
                o_ref[...] += jnp.sum(x, axis=0, keepdims=True)
        else:
            o_ref[...] += jnp.sum(x_ref[...], axis=0, keepdims=True)

    return kernel


def small_nns_aggregated_forward(x_feature_mat, stage1_w, stage2_w,
                                 num_sensors_on, *,
                                 tile_rows=512, min_pallas_rows=8192):
    """Forward of SmallNNsAggregatedModel. Returns a (1,) float32 array."""
    x = jnp.asarray(x_feature_mat, dtype=jnp.float32)
    f = x.shape[-1]                                   # 27 features
    assert f == _F, f"expected {_F} features, got {f}"
    x2d = x.reshape(-1, f)                            # (N, 27), row-major
    n = x2d.shape[0]

    w1 = jnp.asarray(stage1_w, dtype=jnp.float32).reshape(f)        # (27,)
    w2 = jnp.asarray(stage2_w, dtype=jnp.float32).reshape(1)        # (1,)
    ns = jnp.asarray(num_sensors_on, dtype=jnp.float32).reshape(1)  # (1,)
    affine = w2 * ns                                                 # (1,)

    n_main = (n // _ROW_GROUP) * _ROW_GROUP           # rows that fit the flat view

    if n < min_pallas_rows or n_main == 0:
        # Sub-crossover workload: pallas_call fixed overhead dominates; XLA
        # fuses this multiply+reduce in a single pass anyway.
        nn_sum = jnp.sum(x2d * w1[None, :])
        return (nn_sum + affine).reshape(1)

    # Leftover rows (N % 128 < 128): tiny, fused by XLA (slice fuses into the
    # reduce, no materialized copy).
    if n_main != n:
        tail_sum = jnp.sum(x2d[n_main:] * w1[None, :])
        # NOTE: the main-part slice below is the only case that may cost one
        # extra HBM copy; when N % 128 == 0 the reshape is a free view.
        x_main = x2d[:n_main]
    else:
        tail_sum = jnp.float32(0.0)
        x_main = x2d

    r_rows = n_main // _ROW_GROUP
    x_flat = x_main.reshape(r_rows, _FLAT_LANES)      # contiguous merge: no copy

    tile_rows = min(tile_rows, r_rows)
    if tile_rows != r_rows and tile_rows % 8 != 0:
        tile_rows = max(8, (tile_rows // 8) * 8)      # (8,128) sublane rule
    n_blocks = pl.cdiv(r_rows, tile_rows)
    splits = min(_num_core_splits(), n_blocks)
    steps_per_split = pl.cdiv(n_blocks, splits)
    needs_mask = (splits * steps_per_split * tile_rows != r_rows)

    def x_index_map(c, i):
        blk = c * steps_per_split + i
        # Clamp so over-allocated grid steps never issue an OOB DMA; the
        # in-kernel mask zeroes their (duplicate) contribution.
        return (jnp.minimum(blk, n_blocks - 1), 0)

    kernel = _make_colsum_kernel(tile_rows, steps_per_split, r_rows, needs_mask)

    total_elems = n_main * f
    cost = pl.CostEstimate(
        flops=2 * total_elems,
        transcendentals=0,
        bytes_accessed=total_elems * 4 + splits * _FLAT_LANES * 4,
    )

    partials = pl.pallas_call(
        kernel,
        out_shape=jax.ShapeDtypeStruct((1, splits * _FLAT_LANES), jnp.float32),
        grid=(splits, steps_per_split),
        in_specs=[pl.BlockSpec((tile_rows, _FLAT_LANES), x_index_map)],
        out_specs=pl.BlockSpec((1, _FLAT_LANES), lambda c, i: (0, c)),
        compiler_params=pltpu.CompilerParams(
            dimension_semantics=("parallel", "arbitrary"),
            vmem_limit_bytes=32 * 1024 * 1024),
        cost_estimate=cost,
    )(x_flat)

    # Per-split lane-dense column sums; flat weight pattern repeats every 27
    # lanes, so a single (1, 3456) weight row finishes the dot product.
    w_row = jnp.tile(w1[None, :], (1, _ROW_GROUP))                   # (1, 3456)
    nn_sum = jnp.sum(partials.reshape(splits, _FLAT_LANES) * w_row) + tail_sum
    return (nn_sum + affine).reshape(1)


if __name__ == "__main__":
    key = jax.random.PRNGKey(0)
    k1, k2, kw1, kw2 = jax.random.split(key, 4)

    F = 27
    stage1_w = jax.random.normal(kw1, (F, 1), dtype=jnp.float32)
    stage2_w = jax.random.normal(kw2, (1,), dtype=jnp.float32)
    num_sensors_on = 5.0

    fwd = jax.jit(small_nns_aggregated_forward,
                  static_argnames=("tile_rows", "min_pallas_rows"))

    def reference(x, w1, w2, ns_val):
        # Elementwise f32 reference, mathematically identical to
        # sum(x @ w1) + w2*[ns] but independent of TPU matmul precision.
        x2d = jnp.asarray(x, jnp.float32).reshape(-1, F)
        nn_sum = jnp.sum(x2d * w1.reshape(1, F))
        return nn_sum + w2.reshape(1) * jnp.array([ns_val], jnp.float32)

    # 1) Aligned multi-tile case (N % 128 == 0): zero-copy flat view, several
    #    inner grid steps, no masking.  Small tile_rows used only to exercise
    #    the multi-step pipeline at small test shapes.
    N1 = 8192
    x1 = jax.random.normal(k1, (N1, F), dtype=jnp.float32)
    out1 = jax.block_until_ready(
        fwd(x1, stage1_w, stage2_w, num_sensors_on,
            tile_rows=8, min_pallas_rows=512))
    ref1 = reference(x1, stage1_w, stage2_w, num_sensors_on)
    assert out1.shape == (1,)
    assert jnp.allclose(out1, ref1, rtol=1e-3, atol=5e-2), (out1, ref1)

    # 2) Ragged case (N % 128 != 0): exercises the in-kernel row mask on the
    #    last tile plus the fused pure-XLA tail for the leftover <128 rows.
    N2 = 1234
    x2 = jax.random.normal(k2, (N2, F), dtype=jnp.float32)
    out2 = jax.block_until_ready(
        fwd(x2, stage1_w, stage2_w, num_sensors_on,
            tile_rows=8, min_pallas_rows=512))
    ref2 = reference(x2, stage1_w, stage2_w, num_sensors_on)
    assert jnp.allclose(out2, ref2, rtol=1e-3, atol=5e-2), (out2, ref2)

    # 3) Tiny case: dispatches to the fused pure-XLA path (no Pallas launch).
    x3 = x1[:8]
    out3 = jax.block_until_ready(fwd(x3, stage1_w, stage2_w, num_sensors_on))
    ref3 = reference(x3, stage1_w, stage2_w, num_sensors_on)
    assert jnp.allclose(out3, ref3, rtol=1e-4, atol=1e-4), (out3, ref3)

    print("KERNEL_OK")
</pallas_src>

<mosaic_0001>
module attributes {stable_mosaic.version = 11 : i64} {
  func.func @kernel(%arg0: i32, %arg1: i32, %arg2: memref<8x3456xf32, #tpu.memory_space<vmem>>, %arg3: memref<1x3456xf32, #tpu.memory_space<vmem>>) attributes {dimension_semantics = [#tpu.dimension_semantics<parallel>, #tpu.dimension_semantics<arbitrary>], iteration_bounds = array<i64: 1, 8>, scalar_prefetch = 0 : i64, scratch_operands = 0 : i64, tpu.core_type = #tpu.core_type<tc>, window_params = [{transform_indices = @transform_0, window_bounds = array<i64: 8, 3456>}, {transform_indices = @transform_1, window_bounds = array<i64: 1, 3456>}]} {
    %c0_i32 = arith.constant 0 : i32
    %0 = arith.cmpi eq, %arg1, %c0_i32 : i32
    %1 = arith.extui %0 : i1 to i32
    %c0_i32_0 = arith.constant 0 : i32
    %2 = arith.cmpi ne, %1, %c0_i32_0 : i32
    scf.if %2 {
      %cst_6 = arith.constant 0.000000e+00 : f32
      %9 = vector.broadcast %cst_6 : f32 to vector<1x3456xf32>
      %c0_7 = arith.constant 0 : index
      %c0_8 = arith.constant 0 : index
      %10 = vector.load %arg3[%c0_7, %c0_8] : memref<1x3456xf32, #tpu.memory_space<vmem>>, vector<1x3456xf32>
      tpu.vector_store %arg3[%c0_7, %c0_8], %9 {strides = array<i32>} : memref<1x3456xf32, #tpu.memory_space<vmem>>, vector<1x3456xf32>,
    } else {
    }
    %c0 = arith.constant 0 : index
    %c0_1 = arith.constant 0 : index
    %3 = vector.load %arg3[%c0, %c0_1] : memref<1x3456xf32, #tpu.memory_space<vmem>>, vector<1x3456xf32>
    %c0_2 = arith.constant 0 : index
    %c0_3 = arith.constant 0 : index
    %4 = vector.load %arg2[%c0_2, %c0_3] : memref<8x3456xf32, #tpu.memory_space<vmem>>, vector<8x3456xf32>
    %cst = arith.constant dense<0.000000e+00> : vector<3456xf32>
    %5 = vector.multi_reduction <add>, %4, %cst [0] : vector<8x3456xf32> to vector<3456xf32>
    %6 = vector.shape_cast %5 : vector<3456xf32> to vector<1x3456xf32>
    %7 = arith.addf %3, %6 : vector<1x3456xf32>
    %c0_4 = arith.constant 0 : index
    %c0_5 = arith.constant 0 : index
    %8 = vector.load %arg3[%c0_4, %c0_5] : memref<1x3456xf32, #tpu.memory_space<vmem>>, vector<1x3456xf32>
    tpu.vector_store %arg3[%c0_4, %c0_5], %7 {strides = array<i32>} : memref<1x3456xf32, #tpu.memory_space<vmem>>, vector<1x3456xf32>,
    return
  }
  func.func @transform_0(%arg0: i32, %arg1: i32) -> (i32, i32) {
    %c8_i32 = arith.constant 8 : i32
    %0 = arith.muli %arg0, %c8_i32 : i32
    %1 = arith.addi %0, %arg1 : i32
    %c7_i32 = arith.constant 7 : i32
    %2 = arith.minsi %1, %c7_i32 : i32
    %c0_i32 = arith.constant 0 : i32
    %c0_i32_0 = arith.constant 0 : i32
    return %2, %c0_i32 : i32, i32
  }
  func.func @transform_1(%arg0: i32, %arg1: i32) -> (i32, i32) {
    %c0_i32 = arith.constant 0 : i32
    %c0_i32_0 = arith.constant 0 : i32
    return %c0_i32, %arg0 : i32, i32
  }
}

</mosaic_0001>

<llo_original>
// kernel: small_nns_aggregated_forward.1
$region0: #{small_nns_aggregated_forward.1}
  #allocation0 [shape = 'u32[]', space=smem, size = 0x4, offset = 0x4, fixed_abs, tag = 'smem constant byte address 0x4 - core index']
  #allocation1 [shape = 'u32[72,128]{1,0:T(1,128)}', space=vmem, size = 0x9000, scoped, tag = 'internal scratch']
  %s0 = inlined_call_operand.vmem [shape: f32[64,3456], index: 0, kind: input, shape index: {}]
  %s1 = inlined_call_operand.vmem [shape: f32[1,3456], index: 1, kind: output, shape index: {}]
  %s2 = sld [smem:[#allocation0]]
  $region41: #{small_nns_aggregated_forward.1} parent=0
    _
  %s4 = ssub.s32 1, %s2
  %s5 = scalar_select 0, %s4, %s2
  loop: start=0, step=1, limit=10
  $region2: #{small_nns_aggregated_forward.1} parent=0 // loop_pre_header
    _
  $region3: #{small_nns_aggregated_forward.1} parent=0 // loop_header
    %s7 = sphi 0, %s11
    %p8 = scmp.ge.s32.totalorder %s7, 10
    %s14 = sphi 0, %s26
    %s15 = sphi 0, %s22
    %s16 = sphi 0, %s14
    %s17 = sphi 0, %s15
    %s18 = sphi 0, %s16
    %s19 = sphi 0, %s17
    %s37 = sphi 0, %s39
    %s40 = sphi 0, %s37
    %s41 = sphi 0, %s40
    %s57 = sphi 0, %s41
    %s63 = sphi 0, %s65
    %s66 = sphi 0, %s63
    %s67 = sphi 0, %s66
    %s83 = sphi 0, %s67
  $region4: #{small_nns_aggregated_forward.1} parent=0 // loop_header_branch
    %10 = sbr.rel (%p8) target = $region8
  $region5: #{small_nns_aggregated_forward.1} parent=0 // loop_body
    %s12 = ssub.s32 %s7, 1
    %s13 = ssub.s32 %s7, 2
    %s20 = sadd.s32 1, %s15
    %p21 = scmp.ge.s32.totalorder %s20, 8
    %s22 = scalar_select %p21, 0, %s20
    %s23 = sadd.s32 1, %s14
    %s24 = scalar_select %p21, %s23, %s14
    %p25 = scmp.ge.s32.totalorder %s24, 1
    %s26 = scalar_select %p25, 0, %s24
    %s27 = smul.u32 %s14, 8
    %s28 = sadd.s32 %s27, %s15
    %p29 = scmp.lt.s32.totalorder %s28, 7
    %s30 = scalar_select %p29, %s28, 7
    %s31 = smul.u32 %s26, 8
    %s32 = sadd.s32 %s31, %s22
    %p33 = scmp.lt.s32.totalorder %s32, 7
    %s34 = scalar_select %p33, %s32, 7
    %s35 = ssub.s32 %s30, %s34
    %p36 = scmp.eq.s32.totalorder %s35, 0
    %s38 = sadd.s32 %s37, 1
    %s39 = scalar_select %p36, %s37, %s38
    %p42 = pneg %p36
    %p43 = scmp.eq.s32.totalorder %s7, 7
    %p44 = por %p42, %p43
    %p45 = scmp.ne.s32.totalorder %s37, %s40
    %p46 = scmp.eq.s32.totalorder %s7, 0
    %p47 = por %p45, %p46
    %p48 = scmp.ne.s32.totalorder %s37, %s40
    %p49 = scmp.eq.s32.totalorder %s12, 7
    %p50 = por %p48, %p49
    %p51 = scmp.ne.s32.totalorder %s40, %s41
    %p52 = scmp.eq.s32.totalorder %s12, 0
    %p53 = por %p51, %p52
    %p54 = scmp.ne.s32.totalorder %s40, %s41
    %p55 = scmp.eq.s32.totalorder %s13, 7
    %p56 = por %p54, %p55
    %p58 = scmp.ne.s32.totalorder %s41, %s57
    %p59 = scmp.eq.s32.totalorder %s13, 0
    %p60 = por %p58, %p59
    %s61 = ssub.s32 %s14, %s26
    %p62 = scmp.eq.s32.totalorder %s61, 0
    %s64 = sadd.s32 %s63, 1
    %s65 = scalar_select %p62, %s63, %s64
    %p68 = pneg %p62
    %p69 = scmp.eq.s32.totalorder %s7, 7
    %p70 = por %p68, %p69
    %p71 = scmp.ne.s32.totalorder %s63, %s66
    %p72 = scmp.eq.s32.totalorder %s7, 0
    %p73 = por %p71, %p72
    %p74 = scmp.ne.s32.totalorder %s63, %s66
    %p75 = scmp.eq.s32.totalorder %s12, 7
    %p76 = por %p74, %p75
    %p77 = scmp.ne.s32.totalorder %s66, %s67
    %p78 = scmp.eq.s32.totalorder %s12, 0
    %p79 = por %p77, %p78
    %p80 = scmp.ne.s32.totalorder %s66, %s67
    %p81 = scmp.eq.s32.totalorder %s13, 7
    %p82 = por %p80, %p81
    %p84 = scmp.ne.s32.totalorder %s67, %s83
    %p85 = scmp.eq.s32.totalorder %s13, 0
    %p86 = por %p84, %p85
    %p87 = scmp.le.s32.totalorder 1, %s7
    %p88 = scmp.lt.s32.totalorder %s7, 9
    %p89 = pnand %p87, %p88
    %p90 = pneg %p89
    // Predicated region
    $region9: #{small_nns_aggregated_forward.1} parent=5 // pred_check
      _
    $region10: #{small_nns_aggregated_forward.1} parent=5 // pred_check_branch
      %92 = sbr.rel (%p89) target = $region12
    $region11: #{small_nns_aggregated_forward.1} parent=5 // pred_region
      %s93 = ssub.s32 %s7, 1
    $region12: #{small_nns_aggregated_forward.1} parent=5 // pred_fallthru
      _
    %p94 = scmp.lt.s32.totalorder %s7, 8
    // Predicated region
    $region13: #{small_nns_aggregated_forward.1} parent=5 // pred_check
      %p95 = pneg %p94
    $region14: #{small_nns_aggregated_forward.1} parent=5 // pred_check_branch
      %97 = sbr.rel (%p95) target = $region16
    $region15: #{small_nns_aggregated_forward.1} parent=5 // pred_region
      // Predicated region
      $region17: #{small_nns_aggregated_forward.1} parent=15 // pred_check
        %p98 = pneg %p47
      $region18: #{small_nns_aggregated_forward.1} parent=15 // pred_check_branch
        %100 = sbr.rel (%p98) target = $region20
      $region19: #{small_nns_aggregated_forward.1} parent=15 // pred_region
        %s101 = smul.u32 %s14, 8
        %s102 = sadd.s32 %s101, %s15
        %p103 = scmp.lt.s32.totalorder %s102, 7
        %s104 = scalar_select %p103, %s102, 7
        %p105 = scmp.lt.s32.totalorder %s104, 7
        %s106 = scalar_select %p105, %s104, 7
        %s107 = smul.addr %s106, 27
        %s108 = smul.addr %s107, 8
        %s109 = scalar_lea.vmem %s0, %s108
        %s110 = smul.u32 %s14, 8
        %s111 = sadd.s32 %s110, %s15
        %p112 = scmp.lt.s32.totalorder %s111, 7
        %s113 = scalar_select %p112, %s111, 7
      $region20: #{small_nns_aggregated_forward.1} parent=15 // pred_fallthru
        _
    $region16: #{small_nns_aggregated_forward.1} parent=5 // pred_fallthru
      _
    %p114 = scmp.le.s32.totalorder 1, %s7
    %p115 = scmp.lt.s32.totalorder %s7, 9
    %p116 = pnand %p114, %p115
    %p117 = pneg %p116
    // Predicated region
    $region21: #{small_nns_aggregated_forward.1} parent=5 // pred_check
      _
    $region22: #{small_nns_aggregated_forward.1} parent=5 // pred_check_branch
      %119 = sbr.rel (%p116) target = $region24
    $region23: #{small_nns_aggregated_forward.1} parent=5 // pred_region
      %s120 = ssub.s32 %s7, 1
      %s121 = smul.u32 %s16, 8
      %s122 = sadd.s32 %s121, %s17
      %p123 = scmp.lt.s32.totalorder %s122, 7
      %s124 = scalar_select %p123, %s122, 7
      %p125 = scmp.lt.s32.totalorder %s124, 7
      %s126 = scalar_select %p125, %s124, 7
      %s127 = smul.addr %s126, 27
      %s128 = smul.addr %s127, 8
      %s129 = scalar_lea.vmem %s0, %s128
      %p130 = pneg %p53
      %p131 = pneg %p50
      %p132 = pneg %p79
      %p133 = pneg %p76
      %s134 = smul.u32 27, %s16
      %p135 = scmp.lt.s32.totalorder %s134, 26
      %s136 = scalar_select %p135, %s134, 26
      %s137 = scalar_lea.vmem %s1, %s136
      %s138 = smul.u32 %s16, 8
      %s139 = sadd.s32 %s138, %s17
      %p140 = scmp.lt.s32.totalorder %s139, 7
      %s141 = scalar_select %p140, %s139, 7
      %p142 = scmp.lt.s32.totalorder %s141, 7
      %s143 = scalar_select %p142, %s141, 7
      %s144 = smul.addr %s143, 27
      %s145 = smul.addr %s144, 8
      %s146 = scalar_lea.vmem %s0, %s145
      %s147 = smul.u32 %s16, 8
      %s148 = sadd.s32 %s147, %s17
      %p149 = scmp.lt.s32.totalorder %s148, 7
      %s150 = scalar_select %p149, %s148, 7
      %s151 = smul.u32 27, %s16
      %p152 = scmp.lt.s32.totalorder %s151, 26
      %s153 = scalar_select %p152, %s151, 26
      %s154 = scalar_lea.vmem %s1, %s153
      %s155 = smul.u32 27, %s16
      %p156 = scmp.eq.s32.totalorder %s17, 0
      // Predicated region
      $region25: #{small_nns_aggregated_forward.1} parent=23 // pred_check
        %p157 = pneg %p156
      $region26: #{small_nns_aggregated_forward.1} parent=23 // pred_check_branch
        %159 = sbr.rel (%p157) target = $region28
      $region27: #{small_nns_aggregated_forward.1} parent=23 // pred_region
        %160 = vst [vmem:[%s154] sm:$0xff] 0.0
        %161 = vst [vmem:[%s154 + $0x8] sm:$0xff] 0.0
        %162 = vst [vmem:[%s154 + $0x10] sm:$0xff] 0.0
        %v163 = vlaneseq
        %vm164 = vcmp.ge.s32.totalorder %v163, 0
        %vm165 = vcmp.lt.s32.totalorder %v163, 384
        %vm166 = vmand %vm164, %vm165
        %167 = vst.msk [vmem:[%s154 + $0x18] sm:$0x7] %vm166, 0.0
      $region28: #{small_nns_aggregated_forward.1} parent=23 // pred_fallthru
        _
      %v168 = vld [vmem:[%s154] sm:$0xff]
      %v169 = vld [vmem:[%s154 + $0x8] sm:$0xff]
      %v170 = vld [vmem:[%s154 + $0x10] sm:$0xff]
      %v171 = vld [vmem:[%s154 + $0x18] sm:$0x7]
      %v172 = vld [vmem:[%s146] sm:$0xff]
      %v173 = vld [vmem:[%s146 + $0x8] sm:$0xff]
      %v174 = vld [vmem:[%s146 + $0x10] sm:$0xff]
      %v175 = vld [vmem:[%s146 + $0x18] sm:$0xff]
      %v176 = vld [vmem:[%s146 + $0x20] sm:$0xff]
      %v177 = vld [vmem:[%s146 + $0x28] sm:$0xff]
      %v178 = vld [vmem:[%s146 + $0x30] sm:$0xff]
      %v179 = vld [vmem:[%s146 + $0x38] sm:$0xff]
      %v180 = vld [vmem:[%s146 + $0x40] sm:$0xff]
      %v181 = vld [vmem:[%s146 + $0x48] sm:$0xff]
      %v182 = vld [vmem:[%s146 + $0x50] sm:$0xff]
      %v183 = vld [vmem:[%s146 + $0x58] sm:$0xff]
      %v184 = vld [vmem:[%s146 + $0x60] sm:$0xff]
      %v185 = vld [vmem:[%s146 + $0x68] sm:$0xff]
      %v186 = vld [vmem:[%s146 + $0x70] sm:$0xff]
      %v187 = vld [vmem:[%s146 + $0x78] sm:$0xff]
      %v188 = vld [vmem:[%s146 + $0x80] sm:$0xff]
      %v189 = vld [vmem:[%s146 + $0x88] sm:$0xff]
      %v190 = vld [vmem:[%s146 + $0x90] sm:$0xff]
      %v191 = vld [vmem:[%s146 + $0x98] sm:$0xff]
      %v192 = vld [vmem:[%s146 + $0xa0] sm:$0xff]
      %v193 = vld [vmem:[%s146 + $0xa8] sm:$0xff]
      %v194 = vld [vmem:[%s146 + $0xb0] sm:$0xff]
      %v195 = vld [vmem:[%s146 + $0xb8] sm:$0xff]
      %v196 = vld [vmem:[%s146 + $0xc0] sm:$0xff]
      %v197 = vld [vmem:[%s146 + $0xc8] sm:$0xff]
      %v198 = vld [vmem:[%s146 + $0xd0] sm:$0xff]
      %v199 = vrot.slane %v172, 4
      %v200 = vadd.f32 %v172, %v199
      %v201 = vrot.slane %v200, 2
      %v202 = vadd.f32 %v200, %v201
      %v203 = vrot.slane %v202, 1
      %v204 = vadd.f32 %v202, %v203
      %v205 = vrot.slane %v173, 4
      %v206 = vadd.f32 %v173, %v205
      %v207 = vrot.slane %v206, 2
      %v208 = vadd.f32 %v206, %v207
      %v209 = vrot.slane %v208, 1
      %v210 = vadd.f32 %v208, %v209
      %v211 = vrot.slane %v174, 4
      %v212 = vadd.f32 %v174, %v211
      %v213 = vrot.slane %v212, 2
      %v214 = vadd.f32 %v212, %v213
      %v215 = vrot.slane %v214, 1
      %v216 = vadd.f32 %v214, %v215
      %v217 = vrot.slane %v175, 4
      %v218 = vadd.f32 %v175, %v217
      %v219 = vrot.slane %v218, 2
      %v220 = vadd.f32 %v218, %v219
      %v221 = vrot.slane %v220, 1
      %v222 = vadd.f32 %v220, %v221
      %v223 = vrot.slane %v176, 4
      %v224 = vadd.f32 %v176, %v223
      %v225 = vrot.slane %v224, 2
      %v226 = vadd.f32 %v224, %v225
      %v227 = vrot.slane %v226, 1
      %v228 = vadd.f32 %v226, %v227
      %v229 = vrot.slane %v177, 4
      %v230 = vadd.f32 %v177, %v229
      %v231 = vrot.slane %v230, 2
      %v232 = vadd.f32 %v230, %v231
      %v233 = vrot.slane %v232, 1
      %v234 = vadd.f32 %v232, %v233
      %v235 = vrot.slane %v178, 4
      %v236 = vadd.f32 %v178, %v235
      %v237 = vrot.slane %v236, 2
      %v238 = vadd.f32 %v236, %v237
      %v239 = vrot.slane %v238, 1
      %v240 = vadd.f32 %v238, %v239
      %v241 = vrot.slane %v179, 4
      %v242 = vadd.f32 %v179, %v241
      %v243 = vrot.slane %v242, 2
      %v244 = vadd.f32 %v242, %v243
      %v245 = vrot.slane %v244, 1
      %v246 = vadd.f32 %v244, %v245
      %v247 = vrot.slane %v180, 4
      %v248 = vadd.f32 %v180, %v247
      %v249 = vrot.slane %v248, 2
      %v250 = vadd.f32 %v248, %v249
      %v251 = vrot.slane %v250, 1
      %v252 = vadd.f32 %v250, %v251
      %v253 = vrot.slane %v181, 4
      %v254 = vadd.f32 %v181, %v253
      %v255 = vrot.slane %v254, 2
      %v256 = vadd.f32 %v254, %v255
      %v257 = vrot.slane %v256, 1
      %v258 = vadd.f32 %v256, %v257
      %v259 = vrot.slane %v182, 4
      %v260 = vadd.f32 %v182, %v259
      %v261 = vrot.slane %v260, 2
      %v262 = vadd.f32 %v260, %v261
      %v263 = vrot.slane %v262, 1
      %v264 = vadd.f32 %v262, %v263
      %v265 = vrot.slane %v183, 4
      %v266 = vadd.f32 %v183, %v265
      %v267 = vrot.slane %v266, 2
      %v268 = vadd.f32 %v266, %v267
      %v269 = vrot.slane %v268, 1
      %v270 = vadd.f32 %v268, %v269
      %v271 = vrot.slane %v184, 4
      %v272 = vadd.f32 %v184, %v271
      %v273 = vrot.slane %v272, 2
      %v274 = vadd.f32 %v272, %v273
      %v275 = vrot.slane %v274, 1
      %v276 = vadd.f32 %v274, %v275
      %v277 = vrot.slane %v185, 4
      %v278 = vadd.f32 %v185, %v277
      %v279 = vrot.slane %v278, 2
      %v280 = vadd.f32 %v278, %v279
      %v281 = vrot.slane %v280, 1
      %v282 = vadd.f32 %v280, %v281
      %v283 = vrot.slane %v186, 4
      %v284 = vadd.f32 %v186, %v283
      %v285 = vrot.slane %v284, 2
      %v286 = vadd.f32 %v284, %v285
      %v287 = vrot.slane %v286, 1
      %v288 = vadd.f32 %v286, %v287
      %v289 = vrot.slane %v187, 4
      %v290 = vadd.f32 %v187, %v289
      %v291 = vrot.slane %v290, 2
      %v292 = vadd.f32 %v290, %v291
      %v293 = vrot.slane %v292, 1
      %v294 = vadd.f32 %v292, %v293
      %v295 = vrot.slane %v188, 4
      %v296 = vadd.f32 %v188, %v295
      %v297 = vrot.slane %v296, 2
      %v298 = vadd.f32 %v296, %v297
      %v299 = vrot.slane %v298, 1
      %v300 = vadd.f32 %v298, %v299
      %v301 = vrot.slane %v189, 4
      %v302 = vadd.f32 %v189, %v301
      %v303 = vrot.slane %v302, 2
      %v304 = vadd.f32 %v302, %v303
      %v305 = vrot.slane %v304, 1
      %v306 = vadd.f32 %v304, %v305
      %v307 = vrot.slane %v190, 4
      %v308 = vadd.f32 %v190, %v307
      %v309 = vrot.slane %v308, 2
      %v310 = vadd.f32 %v308, %v309
      %v311 = vrot.slane %v310, 1
      %v312 = vadd.f32 %v310, %v311
      %v313 = vrot.slane %v191, 4
      %v314 = vadd.f32 %v191, %v313
      %v315 = vrot.slane %v314, 2
      %v316 = vadd.f32 %v314, %v315
      %v317 = vrot.slane %v316, 1
      %v318 = vadd.f32 %v316, %v317
      %v319 = vrot.slane %v192, 4
      %v320 = vadd.f32 %v192, %v319
      %v321 = vrot.slane %v320, 2
      %v322 = vadd.f32 %v320, %v321
      %v323 = vrot.slane %v322, 1
      %v324 = vadd.f32 %v322, %v323
      %v325 = vrot.slane %v193, 4
      %v326 = vadd.f32 %v193, %v325
      %v327 = vrot.slane %v326, 2
      %v328 = vadd.f32 %v326, %v327
      %v329 = vrot.slane %v328, 1
      %v330 = vadd.f32 %v328, %v329
      %v331 = vrot.slane %v194, 4
      %v332 = vadd.f32 %v194, %v331
      %v333 = vrot.slane %v332, 2
      %v334 = vadd.f32 %v332, %v333
      %v335 = vrot.slane %v334, 1
      %v336 = vadd.f32 %v334, %v335
      %v337 = vrot.slane %v195, 4
      %v338 = vadd.f32 %v195, %v337
      %v339 = vrot.slane %v338, 2
      %v340 = vadd.f32 %v338, %v339
      %v341 = vrot.slane %v340, 1
      %v342 = vadd.f32 %v340, %v341
      %v343 = vrot.slane %v196, 4
      %v344 = vadd.f32 %v196, %v343
      %v345 = vrot.slane %v344, 2
      %v346 = vadd.f32 %v344, %v345
      %v347 = vrot.slane %v346, 1
      %v348 = vadd.f32 %v346, %v347
      %v349 = vrot.slane %v197, 4
      %v350 = vadd.f32 %v197, %v349
      %v351 = vrot.slane %v350, 2
      %v352 = vadd.f32 %v350, %v351
      %v353 = vrot.slane %v352, 1
      %v354 = vadd.f32 %v352, %v353
      %v355 = vrot.slane %v198, 4
      %v356 = vadd.f32 %v198, %v355
      %v357 = vrot.slane %v356, 2
      %v358 = vadd.f32 %v356, %v357
      %v359 = vrot.slane %v358, 1
      %v360 = vadd.f32 %v358, %v359
      %v388 = vrot.slane %v210, 7
      %v389 = vrot.slane %v216, 6
      %v390 = vrot.slane %v222, 5
      %v391 = vrot.slane %v228, 4
      %v392 = vrot.slane %v234, 3
      %v393 = vrot.slane %v240, 2
      %v394 = vrot.slane %v246, 1
      %v395 = vrot.slane %v258, 7
      %v396 = vrot.slane %v264, 6
      %v397 = vrot.slane %v270, 5
      %v398 = vrot.slane %v276, 4
      %v399 = vrot.slane %v282, 3
      %v400 = vrot.slane %v288, 2
      %v401 = vrot.slane %v294, 1
      %v402 = vrot.slane %v306, 7
      %v403 = vrot.slane %v312, 6
      %v404 = vrot.slane %v318, 5
      %v405 = vrot.slane %v324, 4
      %v406 = vrot.slane %v330, 3
      %v407 = vrot.slane %v336, 2
      %v408 = vrot.slane %v342, 1
      %v409 = vrot.slane %v354, 7
      %v410 = vrot.slane %v360, 6
      %vm411 = vcmask 1040384
      %v412 = vsel %vm411, %v204, %v388
      %vm413 = vcmask 1042434
      %v414 = vsel %vm413, %v389, %v390
      %vm415 = vcmask 1041408
      %v416 = vsel %vm415, %v412, %v414
      %vm417 = vcmask 1044484
      %v418 = vsel %vm417, %v391, %v392
      %vm419 = vcmask 1046534
      %v420 = vsel %vm419, %v393, %v394
      %vm421 = vcmask 1045508
      %v422 = vsel %vm421, %v418, %v420
      %vm423 = vcmask 1043456
      %v424 = vsel %vm423, %v416, %v422
      %v425 = vsel %vm411, %v252, %v395
      %v426 = vsel %vm413, %v396, %v397
      %v427 = vsel %vm415, %v425, %v426
      %v428 = vsel %vm417, %v398, %v399
      %v429 = vsel %vm419, %v400, %v401
      %v430 = vsel %vm421, %v428, %v429
      %v431 = vsel %vm423, %v427, %v430
      %v432 = vsel %vm411, %v300, %v402
      %v433 = vsel %vm413, %v403, %v404
      %v434 = vsel %vm415, %v432, %v433
      %v435 = vsel %vm417, %v405, %v406
      %v436 = vsel %vm419, %v407, %v408
      %v437 = vsel %vm421, %v435, %v436
      %v438 = vsel %vm423, %v434, %v437
      %v439 = vsel %vm411, %v348, %v409
      %v440 = vsel %vm415, %v439, %v410
      %v445 = vadd.f32 %v168, %v424
      %v446 = vadd.f32 %v169, %v431
      %v447 = vadd.f32 %v170, %v438
      %v448 = vadd.f32 %v171, %v440
      %449 = vst [vmem:[%s154] sm:$0xff] %v445
      %450 = vst [vmem:[%s154 + $0x8] sm:$0xff] %v446
      %451 = vst [vmem:[%s154 + $0x10] sm:$0xff] %v447
      %v452 = vlaneseq
      %vm453 = vcmp.ge.s32.totalorder %v452, 0
      %vm454 = vcmp.lt.s32.totalorder %v452, 384
      %vm455 = vmand %vm453, %vm454
      %456 = vst.msk [vmem:[%s154 + $0x18] sm:$0x7] %vm455, %v448
      %s457 = smul.u32 27, %s16
      %p458 = scmp.lt.s32.totalorder %s457, 26
      %s459 = scalar_select %p458, %s457, 26
      %s460 = scalar_lea.vmem %s1, %s459
      // Predicated region
      $region29: #{small_nns_aggregated_forward.1} parent=23 // pred_check
        %p461 = pneg %p76
      $region30: #{small_nns_aggregated_forward.1} parent=23 // pred_check_branch
        %463 = sbr.rel (%p461) target = $region32
      $region31: #{small_nns_aggregated_forward.1} parent=23 // pred_region
        %s464 = smul.u32 27, %s16
      $region32: #{small_nns_aggregated_forward.1} parent=23 // pred_fallthru
        _
      // Predicated region
      $region33: #{small_nns_aggregated_forward.1} parent=23 // pred_check
        %p465 = pneg %p76
      $region34: #{small_nns_aggregated_forward.1} parent=23 // pred_check_branch
        %467 = sbr.rel (%p465) target = $region36
      $region35: #{small_nns_aggregated_forward.1} parent=23 // pred_region
        %s468 = smul.u32 27, %s16
        %p469 = scmp.lt.s32.totalorder %s468, 26
        %s470 = scalar_select %p469, %s468, 26
        %s471 = scalar_lea.vmem %s1, %s470
      $region36: #{small_nns_aggregated_forward.1} parent=23 // pred_fallthru
        _
    $region24: #{small_nns_aggregated_forward.1} parent=5 // pred_fallthru
      _
    %p472 = scmp.le.s32.totalorder 2, %s7
    // Predicated region
    $region37: #{small_nns_aggregated_forward.1} parent=5 // pred_check
      %p473 = pneg %p472
    $region38: #{small_nns_aggregated_forward.1} parent=5 // pred_check_branch
      %475 = sbr.rel (%p473) target = $region40
    $region39: #{small_nns_aggregated_forward.1} parent=5 // pred_region
      %s476 = ssub.s32 %s7, 2
    $region40: #{small_nns_aggregated_forward.1} parent=5 // pred_fallthru
      _
  $region6: #{small_nns_aggregated_forward.1} parent=0 // loop_footer
    %s11 = sadd.s32 1, %s7
  $region7: #{small_nns_aggregated_forward.1} parent=0 // loop_footer_branch
    %6 = sbr.rel target = $region3
  $region8: #{small_nns_aggregated_forward.1} parent=0 // loop_exit
    _

</llo_original>
